<compile_context>
chip_gen: v6e
topology: v6e:2x2x1
jax: 0.10.0
libtpu: 0.0.40
codegen_flags: <defaults>
</compile_context>

<pallas_src>
import jax
import jax.numpy as jnp
from jax import lax
from jax.experimental import pallas as pl
from jax.experimental.pallas import tpu as pltpu

_LANE = 128   # lane width
_SUB = 8      # sublanes per vreg
_CHUNK = _SUB * _LANE   # samples per (8, 128) vreg slab


def feature_kernel(x_ref, p_ref, m2_ref):
    # x_ref : (H, W, TC, 8, 128) f32 VMEM — chunk c holds 1024 samples as an
    #         (8 sublane, 128 lane) slab; H, W are leading (non-vreg) dims.
    # p_ref : (10,) f32 SMEM: [w1 row-major (4), w2 row-major (4), b1, b2]
    # m2_ref: (TC, 8, 128) f32 VMEM — per-sample scalar after conv/min/conv/max
    H, W = x_ref.shape[0], x_ref.shape[1]
    TC = x_ref.shape[2]

    w1_00 = p_ref[0]; w1_01 = p_ref[1]; w1_10 = p_ref[2]; w1_11 = p_ref[3]
    w2_00 = p_ref[4]; w2_10 = p_ref[6]   # 2nd kernel column hits the zero pad
    b1 = p_ref[8]; b2 = p_ref[9]
    # min/max commute with adding a constant -> hoist both biases out of the
    # streaming reductions and add them once per sample at the end.
    out_bias = b1 * (w2_00 + w2_10) + b2

    def conv1_min_row(lo, hi):
        # lo, hi: (W, 8, 128) two adjacent input rows; returns the width-min
        # of the bias-free 2x2 conv output row: (8, 128).  All taps are
        # leading-dim slices -> pure VPU, no relayout.
        t = (lo[: W - 1] * w1_00 + lo[1:] * w1_01
             + hi[: W - 1] * w1_10 + hi[1:] * w1_11)
        return jnp.min(t, axis=0)

    @pl.loop(0, TC)
    def _(c):
        # Stream over H with a 2-row rolling window: live vregs ~ 2*W + 4 per
        # chunk instead of materializing the whole (H, W, TC, 8, 128) block.
        row_lo = x_ref[0, :, c]                    # (W, 8, 128)
        row_hi = x_ref[1, :, c]
        prev = conv1_min_row(row_lo, row_hi)       # m1[0] (bias-free)
        acc = jnp.full_like(prev, -jnp.inf)        # running height-max
        for h in range(1, H - 1):                  # H is small and static
            row_lo = row_hi
            row_hi = x_ref[h + 1, :, c]
            cur = conv1_min_row(row_lo, row_hi)    # m1[h] (bias-free)
            acc = jnp.maximum(acc, prev * w2_00 + cur * w2_10)
            prev = cur
        m2_ref[c] = acc + out_bias                 # (8, 128) lane-dense store


def _choose_tc(n_chunks, H, W):
    """Chunks (1024-sample slabs) per grid step."""
    # ~2 MiB of input per grid step: per-step DMA time comfortably exceeds the
    # ~0.35 us fixed grid-step overhead, while double-buffered input + output
    # stay well under the scoped-VMEM default on v5e/v6e and v7x (64 MiB phys).
    # TODO(synk): for very large H*W (H*W*4KiB per chunk approaching the VMEM
    # limit) this would need an H-tile with a 1-row halo; not needed here.
    chunk_bytes = H * W * _SUB * _LANE * 4
    tc = max(1, (2 * 1024 * 1024) // chunk_bytes)
    # At least 2 grid steps whenever there are >= 2 chunks so the "parallel"
    # grid axis can shard across both v7x TensorCores.
    if n_chunks >= 2:
        tc = min(tc, pl.cdiv(n_chunks, 2))
    return max(1, min(tc, n_chunks))


def model_forward(x_nchw, w1, b1, w2, b2, gamma, beta, eps=1e-5):
    """x_nchw: (N, 1, H, W) f32. Returns (N, 1, 1, 1) f32."""
    N, C, H, W = x_nchw.shape
    assert C == 1 and H >= 3 and W >= 2

    n_chunks = pl.cdiv(N, _CHUNK)
    TC = _choose_tc(n_chunks, H, W)
    c_pad = pl.cdiv(n_chunks, TC) * TC
    n_pad = c_pad * _CHUNK
    grid = (c_pad // TC,)

    # Pack the batch onto (chunk, sublane, lane): (N,1,H,W) -> (H, W, c, 8, 128)
    # TODO(synk): this pad+reshape+transpose is one extra HBM pass over x; in a
    # real pipeline keep activations pre-packed upstream or fuse the relayout
    # into the operand DMA (CompilerParams(allow_input_fusion=...)).
    x3 = x_nchw[:, 0].astype(jnp.float32)                       # (N, H, W)
    x3 = jnp.pad(x3, ((0, n_pad - N), (0, 0), (0, 0)))          # (n_pad, H, W)
    x_l = x3.reshape(c_pad, _SUB, _LANE, H, W).transpose(3, 4, 0, 1, 2)

    conv_params = jnp.concatenate([
        jnp.asarray(w1, jnp.float32).reshape(-1),
        jnp.asarray(w2, jnp.float32).reshape(-1),
        jnp.asarray(b1, jnp.float32).reshape(1),
        jnp.asarray(b2, jnp.float32).reshape(1),
    ])                                                           # (10,)

    cost = pl.CostEstimate(
        flops=int(n_pad * (10 * (H - 1) * (W - 1) + 5 * (H - 1))),
        transcendentals=0,
        bytes_accessed=int(4 * (n_pad * H * W + n_pad) + 4 * conv_params.size),
    )

    m2 = pl.pallas_call(
        feature_kernel,
        out_shape=jax.ShapeDtypeStruct((c_pad, _SUB, _LANE), jnp.float32),
        grid=grid,
        in_specs=[
            pl.BlockSpec((H, W, TC, _SUB, _LANE), lambda i: (0, 0, i, 0, 0)),
            pl.BlockSpec((conv_params.shape[0],), lambda i: (0,),
                         memory_space=pltpu.MemorySpace.SMEM),
        ],
        out_specs=pl.BlockSpec((TC, _SUB, _LANE), lambda i: (i, 0, 0)),
        compiler_params=pltpu.CompilerParams(
            dimension_semantics=("parallel",),
            vmem_limit_bytes=32 * 1024 * 1024,
        ),
        cost_estimate=cost,
    )(x_l, conv_params)

    # BatchNorm2d (training mode, batch statistics) over the N per-sample
    # scalars: a few KB of elementwise work, kept in plain XLA instead of a
    # second kernel launch + HBM round trip.  Padding lanes are sliced away.
    m2_flat = m2.reshape(-1)[:N]
    mu = jnp.mean(m2_flat)
    var = jnp.mean(jnp.square(m2_flat - mu))        # biased variance (BN training)
    y = gamma * (m2_flat - mu) * lax.rsqrt(var + eps) + beta
    return y.reshape(N, 1, 1, 1)


def model_reference(x_nchw, w1, b1, w2, b2, gamma, beta, eps=1e-5):
    """Pure-JAX reference of the same semantics (for correctness check)."""
    xs = x_nchw[:, 0, :, :].astype(jnp.float32)
    out1 = (xs[:, :-1, :-1] * w1[0, 0] + xs[:, :-1, 1:] * w1[0, 1]
            + xs[:, 1:, :-1] * w1[1, 0] + xs[:, 1:, 1:] * w1[1, 1] + b1)
    m1 = jnp.min(out1, axis=-1, keepdims=True)
    out2 = m1[:, :-1, :] * w2[0, 0] + m1[:, 1:, :] * w2[1, 0] + b2
    m2 = jnp.max(out2, axis=1, keepdims=True)
    mu = jnp.mean(m2)
    var = jnp.mean((m2 - mu) ** 2)
    y = gamma * (m2 - mu) / jnp.sqrt(var + eps) + beta
    return y.reshape(x_nchw.shape[0], 1, 1, 1)


if __name__ == "__main__":
    key = jax.random.PRNGKey(0)
    k_x, k_w1, k_b1, k_w2, k_b2 = jax.random.split(key, 5)

    # Spatial dims match the spec's (1, 1, 5, 3); batch is large enough to
    # exercise the multi-chunk loop, the 2-step grid and lane masking, but
    # still small (2600 * 15 floats).
    N, H, W = 2600, 5, 3
    x = jax.random.normal(k_x, (N, 1, H, W), dtype=jnp.float32)

    # Deterministic parameter init (PyTorch-style U(-sqrt(k), sqrt(k)), k=1/4).
    bound = 0.5
    w1 = jax.random.uniform(k_w1, (2, 2), jnp.float32, -bound, bound)
    b1 = jax.random.uniform(k_b1, (), jnp.float32, -bound, bound)
    w2 = jax.random.uniform(k_w2, (2, 2), jnp.float32, -bound, bound)
    b2 = jax.random.uniform(k_b2, (), jnp.float32, -bound, bound)
    gamma = jnp.float32(1.0)   # BatchNorm2d default affine params
    beta = jnp.float32(0.0)

    y = jax.jit(model_forward)(x, w1, b1, w2, b2, gamma, beta)
    y = jax.block_until_ready(y)

    y_ref = model_reference(x, w1, b1, w2, b2, gamma, beta)
    assert y.shape == (N, 1, 1, 1)
    assert jnp.allclose(y, y_ref, atol=1e-4, rtol=1e-4), (y, y_ref)

    print("KERNEL_OK")
</pallas_src>

<mosaic_0001>
module attributes {stable_mosaic.version = 11 : i64} {
  func.func @feature_kernel(%arg0: i32, %arg1: memref<5x3x2x8x128xf32, #tpu.memory_space<vmem>>, %arg2: memref<10xf32, #tpu.memory_space<smem>>, %arg3: memref<2x8x128xf32, #tpu.memory_space<vmem>>) attributes {dimension_semantics = [#tpu.dimension_semantics<parallel>], iteration_bounds = array<i64: 2>, scalar_prefetch = 0 : i64, scratch_operands = 0 : i64, tpu.core_type = #tpu.core_type<tc>, window_params = [{transform_indices = @transform_0, window_bounds = array<i64: 5, 3, 2, 8, 128>}, {transform_indices = @transform_1, window_bounds = array<i64: 10>}, {transform_indices = @transform_2, window_bounds = array<i64: 2, 8, 128>}]} {
    %c0 = arith.constant 0 : index
    %0 = memref.load %arg2[%c0] : memref<10xf32, #tpu.memory_space<smem>>
    %c1 = arith.constant 1 : index
    %1 = memref.load %arg2[%c1] : memref<10xf32, #tpu.memory_space<smem>>
    %c2 = arith.constant 2 : index
    %2 = memref.load %arg2[%c2] : memref<10xf32, #tpu.memory_space<smem>>
    %c3 = arith.constant 3 : index
    %3 = memref.load %arg2[%c3] : memref<10xf32, #tpu.memory_space<smem>>
    %c4 = arith.constant 4 : index
    %4 = memref.load %arg2[%c4] : memref<10xf32, #tpu.memory_space<smem>>
    %c6 = arith.constant 6 : index
    %5 = memref.load %arg2[%c6] : memref<10xf32, #tpu.memory_space<smem>>
    %c8 = arith.constant 8 : index
    %6 = memref.load %arg2[%c8] : memref<10xf32, #tpu.memory_space<smem>>
    %c9 = arith.constant 9 : index
    %7 = memref.load %arg2[%c9] : memref<10xf32, #tpu.memory_space<smem>>
    %8 = arith.addf %4, %5 : f32
    %9 = arith.mulf %6, %8 : f32
    %10 = arith.addf %9, %7 : f32
    %c0_i32 = arith.constant 0 : i32
    %c2_i32 = arith.constant 2 : i32
    %11 = arith.addi %c0_i32, %c2_i32 : i32
    %c1_i32 = arith.constant 1 : i32
    scf.for %arg4 = %c0_i32 to %11 step %c1_i32  : i32 {
      %c1_i32_1 = arith.constant 1 : i32
      %12 = arith.muli %arg4, %c1_i32_1 : i32
      %c0_i32_2 = arith.constant 0 : i32
      %13 = arith.addi %c0_i32_2, %12 : i32
      %c0_3 = arith.constant 0 : index
      %c0_4 = arith.constant 0 : index
      %14 = arith.index_cast %13 : i32 to index
      %c0_5 = arith.constant 0 : index
      %c0_6 = arith.constant 0 : index
      %15 = vector.load %arg1[%c0_3, %c0_4, %14, %c0_5, %c0_6] : memref<5x3x2x8x128xf32, #tpu.memory_space<vmem>>, vector<1x3x1x8x128xf32>
      %16 = vector.shape_cast %15 : vector<1x3x1x8x128xf32> to vector<3x8x128xf32>
      %c1_7 = arith.constant 1 : index
      %c0_8 = arith.constant 0 : index
      %17 = arith.index_cast %13 : i32 to index
      %c0_9 = arith.constant 0 : index
      %c0_10 = arith.constant 0 : index
      %18 = vector.load %arg1[%c1_7, %c0_8, %17, %c0_9, %c0_10] : memref<5x3x2x8x128xf32, #tpu.memory_space<vmem>>, vector<1x3x1x8x128xf32>
      %19 = vector.shape_cast %18 : vector<1x3x1x8x128xf32> to vector<3x8x128xf32>
      %20 = vector.extract_strided_slice %16 {offsets = [0, 0, 0], sizes = [2, 8, 128], strides = [1, 1, 1]} : vector<3x8x128xf32> to vector<2x8x128xf32>
      %21 = vector.broadcast %0 : f32 to vector<2x8x128xf32>
      %22 = arith.mulf %20, %21 : vector<2x8x128xf32>
      %23 = vector.extract_strided_slice %16 {offsets = [1, 0, 0], sizes = [2, 8, 128], strides = [1, 1, 1]} : vector<3x8x128xf32> to vector<2x8x128xf32>
      %24 = vector.broadcast %1 : f32 to vector<2x8x128xf32>
      %25 = arith.mulf %23, %24 : vector<2x8x128xf32>
      %26 = arith.addf %22, %25 : vector<2x8x128xf32>
      %27 = vector.extract_strided_slice %19 {offsets = [0, 0, 0], sizes = [2, 8, 128], strides = [1, 1, 1]} : vector<3x8x128xf32> to vector<2x8x128xf32>
      %28 = vector.broadcast %2 : f32 to vector<2x8x128xf32>
      %29 = arith.mulf %27, %28 : vector<2x8x128xf32>
      %30 = arith.addf %26, %29 : vector<2x8x128xf32>
      %31 = vector.extract_strided_slice %19 {offsets = [1, 0, 0], sizes = [2, 8, 128], strides = [1, 1, 1]} : vector<3x8x128xf32> to vector<2x8x128xf32>
      %32 = vector.broadcast %3 : f32 to vector<2x8x128xf32>
      %33 = arith.mulf %31, %32 : vector<2x8x128xf32>
      %34 = arith.addf %30, %33 : vector<2x8x128xf32>
      %cst = arith.constant dense<0x7F800000> : vector<8x128xf32>
      %35 = vector.multi_reduction <minimumf>, %34, %cst [0] : vector<2x8x128xf32> to vector<8x128xf32>
      %cst_11 = arith.constant 0xFF800000 : f32
      %36 = vector.broadcast %cst_11 : f32 to vector<8x128xf32>
      %c2_12 = arith.constant 2 : index
      %c0_13 = arith.constant 0 : index
      %37 = arith.index_cast %13 : i32 to index
      %c0_14 = arith.constant 0 : index
      %c0_15 = arith.constant 0 : index
      %38 = vector.load %arg1[%c2_12, %c0_13, %37, %c0_14, %c0_15] : memref<5x3x2x8x128xf32, #tpu.memory_space<vmem>>, vector<1x3x1x8x128xf32>
      %39 = vector.shape_cast %38 : vector<1x3x1x8x128xf32> to vector<3x8x128xf32>
      %40 = vector.extract_strided_slice %19 {offsets = [0, 0, 0], sizes = [2, 8, 128], strides = [1, 1, 1]} : vector<3x8x128xf32> to vector<2x8x128xf32>
      %41 = vector.broadcast %0 : f32 to vector<2x8x128xf32>
      %42 = arith.mulf %40, %41 : vector<2x8x128xf32>
      %43 = vector.extract_strided_slice %19 {offsets = [1, 0, 0], sizes = [2, 8, 128], strides = [1, 1, 1]} : vector<3x8x128xf32> to vector<2x8x128xf32>
      %44 = vector.broadcast %1 : f32 to vector<2x8x128xf32>
      %45 = arith.mulf %43, %44 : vector<2x8x128xf32>
      %46 = arith.addf %42, %45 : vector<2x8x128xf32>
      %47 = vector.extract_strided_slice %39 {offsets = [0, 0, 0], sizes = [2, 8, 128], strides = [1, 1, 1]} : vector<3x8x128xf32> to vector<2x8x128xf32>
      %48 = vector.broadcast %2 : f32 to vector<2x8x128xf32>
      %49 = arith.mulf %47, %48 : vector<2x8x128xf32>
      %50 = arith.addf %46, %49 : vector<2x8x128xf32>
      %51 = vector.extract_strided_slice %39 {offsets = [1, 0, 0], sizes = [2, 8, 128], strides = [1, 1, 1]} : vector<3x8x128xf32> to vector<2x8x128xf32>
      %52 = vector.broadcast %3 : f32 to vector<2x8x128xf32>
      %53 = arith.mulf %51, %52 : vector<2x8x128xf32>
      %54 = arith.addf %50, %53 : vector<2x8x128xf32>
      %cst_16 = arith.constant dense<0x7F800000> : vector<8x128xf32>
      %55 = vector.multi_reduction <minimumf>, %54, %cst_16 [0] : vector<2x8x128xf32> to vector<8x128xf32>
      %56 = vector.broadcast %4 : f32 to vector<8x128xf32>
      %57 = arith.mulf %35, %56 : vector<8x128xf32>
      %58 = vector.broadcast %5 : f32 to vector<8x128xf32>
      %59 = arith.mulf %55, %58 : vector<8x128xf32>
      %60 = arith.addf %57, %59 : vector<8x128xf32>
      %61 = arith.maximumf %36, %60 : vector<8x128xf32>
      %c3_17 = arith.constant 3 : index
      %c0_18 = arith.constant 0 : index
      %62 = arith.index_cast %13 : i32 to index
      %c0_19 = arith.constant 0 : index
      %c0_20 = arith.constant 0 : index
      %63 = vector.load %arg1[%c3_17, %c0_18, %62, %c0_19, %c0_20] : memref<5x3x2x8x128xf32, #tpu.memory_space<vmem>>, vector<1x3x1x8x128xf32>
      %64 = vector.shape_cast %63 : vector<1x3x1x8x128xf32> to vector<3x8x128xf32>
      %65 = vector.extract_strided_slice %39 {offsets = [0, 0, 0], sizes = [2, 8, 128], strides = [1, 1, 1]} : vector<3x8x128xf32> to vector<2x8x128xf32>
      %66 = vector.broadcast %0 : f32 to vector<2x8x128xf32>
      %67 = arith.mulf %65, %66 : vector<2x8x128xf32>
      %68 = vector.extract_strided_slice %39 {offsets = [1, 0, 0], sizes = [2, 8, 128], strides = [1, 1, 1]} : vector<3x8x128xf32> to vector<2x8x128xf32>
      %69 = vector.broadcast %1 : f32 to vector<2x8x128xf32>
      %70 = arith.mulf %68, %69 : vector<2x8x128xf32>
      %71 = arith.addf %67, %70 : vector<2x8x128xf32>
      %72 = vector.extract_strided_slice %64 {offsets = [0, 0, 0], sizes = [2, 8, 128], strides = [1, 1, 1]} : vector<3x8x128xf32> to vector<2x8x128xf32>
      %73 = vector.broadcast %2 : f32 to vector<2x8x128xf32>
      %74 = arith.mulf %72, %73 : vector<2x8x128xf32>
      %75 = arith.addf %71, %74 : vector<2x8x128xf32>
      %76 = vector.extract_strided_slice %64 {offsets = [1, 0, 0], sizes = [2, 8, 128], strides = [1, 1, 1]} : vector<3x8x128xf32> to vector<2x8x128xf32>
      %77 = vector.broadcast %3 : f32 to vector<2x8x128xf32>
      %78 = arith.mulf %76, %77 : vector<2x8x128xf32>
      %79 = arith.addf %75, %78 : vector<2x8x128xf32>
      %cst_21 = arith.constant dense<0x7F800000> : vector<8x128xf32>
      %80 = vector.multi_reduction <minimumf>, %79, %cst_21 [0] : vector<2x8x128xf32> to vector<8x128xf32>
      %81 = vector.broadcast %4 : f32 to vector<8x128xf32>
      %82 = arith.mulf %55, %81 : vector<8x128xf32>
      %83 = vector.broadcast %5 : f32 to vector<8x128xf32>
      %84 = arith.mulf %80, %83 : vector<8x128xf32>
      %85 = arith.addf %82, %84 : vector<8x128xf32>
      %86 = arith.maximumf %61, %85 : vector<8x128xf32>
      %c4_22 = arith.constant 4 : index
      %c0_23 = arith.constant 0 : index
      %87 = arith.index_cast %13 : i32 to index
      %c0_24 = arith.constant 0 : index
      %c0_25 = arith.constant 0 : index
      %88 = vector.load %arg1[%c4_22, %c0_23, %87, %c0_24, %c0_25] : memref<5x3x2x8x128xf32, #tpu.memory_space<vmem>>, vector<1x3x1x8x128xf32>
      %89 = vector.shape_cast %88 : vector<1x3x1x8x128xf32> to vector<3x8x128xf32>
      %90 = vector.extract_strided_slice %64 {offsets = [0, 0, 0], sizes = [2, 8, 128], strides = [1, 1, 1]} : vector<3x8x128xf32> to vector<2x8x128xf32>
      %91 = vector.broadcast %0 : f32 to vector<2x8x128xf32>
      %92 = arith.mulf %90, %91 : vector<2x8x128xf32>
      %93 = vector.extract_strided_slice %64 {offsets = [1, 0, 0], sizes = [2, 8, 128], strides = [1, 1, 1]} : vector<3x8x128xf32> to vector<2x8x128xf32>
      %94 = vector.broadcast %1 : f32 to vector<2x8x128xf32>
      %95 = arith.mulf %93, %94 : vector<2x8x128xf32>
      %96 = arith.addf %92, %95 : vector<2x8x128xf32>
      %97 = vector.extract_strided_slice %89 {offsets = [0, 0, 0], sizes = [2, 8, 128], strides = [1, 1, 1]} : vector<3x8x128xf32> to vector<2x8x128xf32>
      %98 = vector.broadcast %2 : f32 to vector<2x8x128xf32>
      %99 = arith.mulf %97, %98 : vector<2x8x128xf32>
      %100 = arith.addf %96, %99 : vector<2x8x128xf32>
      %101 = vector.extract_strided_slice %89 {offsets = [1, 0, 0], sizes = [2, 8, 128], strides = [1, 1, 1]} : vector<3x8x128xf32> to vector<2x8x128xf32>
      %102 = vector.broadcast %3 : f32 to vector<2x8x128xf32>
      %103 = arith.mulf %101, %102 : vector<2x8x128xf32>
      %104 = arith.addf %100, %103 : vector<2x8x128xf32>
      %cst_26 = arith.constant dense<0x7F800000> : vector<8x128xf32>
      %105 = vector.multi_reduction <minimumf>, %104, %cst_26 [0] : vector<2x8x128xf32> to vector<8x128xf32>
      %106 = vector.broadcast %4 : f32 to vector<8x128xf32>
      %107 = arith.mulf %80, %106 : vector<8x128xf32>
      %108 = vector.broadcast %5 : f32 to vector<8x128xf32>
      %109 = arith.mulf %105, %108 : vector<8x128xf32>
      %110 = arith.addf %107, %109 : vector<8x128xf32>
      %111 = arith.maximumf %86, %110 : vector<8x128xf32>
      %112 = vector.broadcast %10 : f32 to vector<8x128xf32>
      %113 = arith.addf %111, %112 : vector<8x128xf32>
      %114 = arith.index_cast %13 : i32 to index
      %c0_27 = arith.constant 0 : index
      %c0_28 = arith.constant 0 : index
      %115 = vector.load %arg3[%114, %c0_27, %c0_28] : memref<2x8x128xf32, #tpu.memory_space<vmem>>, vector<1x8x128xf32>
      %116 = vector.shape_cast %115 : vector<1x8x128xf32> to vector<8x128xf32>
      %117 = vector.shape_cast %113 : vector<8x128xf32> to vector<1x8x128xf32>
      tpu.vector_store %arg3[%114, %c0_27, %c0_28], %117 {strides = array<i32>} : memref<2x8x128xf32, #tpu.memory_space<vmem>>, vector<1x8x128xf32>,
    }
    %c2_i32_0 = arith.constant 2 : i32
    return
  }
  func.func @transform_0(%arg0: i32) -> (i32, i32, i32, i32, i32) {
    %c0_i32 = arith.constant 0 : i32
    %c0_i32_0 = arith.constant 0 : i32
    %c0_i32_1 = arith.constant 0 : i32
    %c0_i32_2 = arith.constant 0 : i32
    %c0_i32_3 = arith.constant 0 : i32
    return %c0_i32, %c0_i32_0, %arg0, %c0_i32_1, %c0_i32_2 : i32, i32, i32, i32, i32
  }
  func.func @transform_1(%arg0: i32) -> i32 {
    %c0_i32 = arith.constant 0 : i32
    %c0_i32_0 = arith.constant 0 : i32
    return %c0_i32 : i32
  }
  func.func @transform_2(%arg0: i32) -> (i32, i32, i32) {
    %c0_i32 = arith.constant 0 : i32
    %c0_i32_0 = arith.constant 0 : i32
    %c0_i32_1 = arith.constant 0 : i32
    return %arg0, %c0_i32, %c0_i32_0 : i32, i32, i32
  }
}

</mosaic_0001>

<llo_original>
// kernel: model_forward.1
$region0: #{model_forward.1}
  #allocation0 [shape = 'u32[]', space=smem, size = 0x4, offset = 0x4, fixed_abs, tag = 'smem constant byte address 0x4 - core index']
  #allocation1 [shape = 'u32[144,128]{1,0:T(1,128)}', space=vmem, size = 0x12000, scoped, tag = 'internal scratch']
  %s0 = inlined_call_operand.vmem [shape: f32[5,3,4,8,128], index: 0, kind: input, shape index: {}]
  %s1 = inlined_call_operand.vmem [shape: f32[10], index: 1, kind: input, shape index: {}]
  %s2 = inlined_call_operand.vmem [shape: f32[4,8,128], index: 2, kind: output, shape index: {}]
  %s3 = sld [smem:[#allocation0]]
  $region90: #{model_forward.1} parent=0
    _
  %s5 = ssub.s32 1, %s3
  %s6 = scalar_select 0, %s5, %s3
  $region1: #{model_forward.1} parent=0
    #allocation2 [shape = 'u8[245760]{0}', space=vmem, size = 0x3c000, scoped, tag = 'input window, operand 0']
    #allocation3 [shape = 'u8[512]{0}', space=smem, size = 0x200, scoped, tag = 'input window, operand 1, single buffered']
    #allocation4 [shape = 's32[2]{0}', space=sflag, size = 0x8, scoped, tag = 'scoped memory for model_forward.1']
    %7 = vsyncpa [#allocation4], 0
    loop: start=0, step=1, limit=4
    $region2: #{model_forward.1} parent=1 // loop_pre_header
      _
    $region3: #{model_forward.1} parent=1 // loop_header
      %s9 = sphi 0, %s13
      %p10 = scmp.ge.s32.totalorder %s9, 4
      %s19 = sphi 0, %s21
      %s22 = sphi 0, %s19
      %s23 = sphi 0, %s22
      %s39 = sphi 0, %s23
      %s43 = sphi 0, %s43
      %s45 = sphi 0, %s43
      %s46 = sphi 0, %s45
      %s60 = sphi 0, %s46
      %s66 = sphi 0, %s68
      %s69 = sphi 0, %s66
      %s70 = sphi 0, %s69
      %s86 = sphi 0, %s70
    $region4: #{model_forward.1} parent=1 // loop_header_branch
      %12 = sbr.rel (%p10) target = $region8
    $region5: #{model_forward.1} parent=1 // loop_body
      %s14 = ssub.s32 %s9, 1
      %s15 = ssub.s32 %s9, 2
      %s16 = sadd.s32 %s9, 1
      %s17 = ssub.s32 %s9, %s16
      %p18 = scmp.eq.s32.totalorder %s17, 0
      %s20 = sadd.s32 %s19, 1
      %s21 = scalar_select %p18, %s19, %s20
      %p24 = pneg %p18
      %p25 = scmp.eq.s32.totalorder %s9, 1
      %p26 = por %p24, %p25
      %p27 = scmp.ne.s32.totalorder %s19, %s22
      %p28 = scmp.eq.s32.totalorder %s9, 0
      %p29 = por %p27, %p28
      %p30 = scmp.ne.s32.totalorder %s19, %s22
      %p31 = scmp.eq.s32.totalorder %s14, 1
      %p32 = por %p30, %p31
      %p33 = scmp.ne.s32.totalorder %s22, %s23
      %p34 = scmp.eq.s32.totalorder %s14, 0
      %p35 = por %p33, %p34
      %p36 = scmp.ne.s32.totalorder %s22, %s23
      %p37 = scmp.eq.s32.totalorder %s15, 1
      %p38 = por %p36, %p37
      %p40 = scmp.ne.s32.totalorder %s23, %s39
      %p41 = scmp.eq.s32.totalorder %s15, 0
      %p42 = por %p40, %p41
      %s44 = sadd.s32 %s43, 1
      %p47 = scmp.eq.s32.totalorder %s9, 1
      %p48 = scmp.ne.s32.totalorder %s43, %s45
      %p49 = scmp.eq.s32.totalorder %s9, 0
      %p50 = por %p48, %p49
      %p51 = scmp.ne.s32.totalorder %s43, %s45
      %p52 = scmp.eq.s32.totalorder %s14, 1
      %p53 = por %p51, %p52
      %p54 = scmp.ne.s32.totalorder %s45, %s46
      %p55 = scmp.eq.s32.totalorder %s14, 0
      %p56 = por %p54, %p55
      %p57 = scmp.ne.s32.totalorder %s45, %s46
      %p58 = scmp.eq.s32.totalorder %s15, 1
      %p59 = por %p57, %p58
      %p61 = scmp.ne.s32.totalorder %s46, %s60
      %p62 = scmp.eq.s32.totalorder %s15, 0
      %p63 = por %p61, %p62
      %s64 = ssub.s32 %s9, %s16
      %p65 = scmp.eq.s32.totalorder %s64, 0
      %s67 = sadd.s32 %s66, 1
      %s68 = scalar_select %p65, %s66, %s67
      %p71 = pneg %p65
      %p72 = scmp.eq.s32.totalorder %s9, 1
      %p73 = por %p71, %p72
      %p74 = scmp.ne.s32.totalorder %s66, %s69
      %p75 = scmp.eq.s32.totalorder %s9, 0
      %p76 = por %p74, %p75
      %p77 = scmp.ne.s32.totalorder %s66, %s69
      %p78 = scmp.eq.s32.totalorder %s14, 1
      %p79 = por %p77, %p78
      %p80 = scmp.ne.s32.totalorder %s69, %s70
      %p81 = scmp.eq.s32.totalorder %s14, 0
      %p82 = por %p80, %p81
      %p83 = scmp.ne.s32.totalorder %s69, %s70
      %p84 = scmp.eq.s32.totalorder %s15, 1
      %p85 = por %p83, %p84
      %p87 = scmp.ne.s32.totalorder %s70, %s86
      %p88 = scmp.eq.s32.totalorder %s15, 0
      %p89 = por %p87, %p88
      %p90 = scmp.le.s32.totalorder 1, %s9
      %p91 = scmp.lt.s32.totalorder %s9, 3
      %p92 = pnand %p90, %p91
      %p93 = pneg %p92
      // Predicated region
      $region9: #{model_forward.1} parent=5 // pred_check
        _
      $region10: #{model_forward.1} parent=5 // pred_check_branch
        %95 = sbr.rel (%p92) target = $region12
      $region11: #{model_forward.1} parent=5 // pred_region
        %s96 = ssub.s32 %s9, 1
        // Predicated region
        $region13: #{model_forward.1} parent=11 // pred_check
          %p97 = pneg %p56
        $region14: #{model_forward.1} parent=11 // pred_check_branch
          %99 = sbr.rel (%p97) target = $region16
        $region15: #{model_forward.1} parent=11 // pred_region
          %s101 = ssub.s32 16, 16
          %102 = vsyncadd [#allocation4], %s101
          %s104 = sshll.u32 %s1, 4
          %s105 = int_to_ptr.vmem [resolvable:$true] %s104
          %107 = dma.vmem_to_smem %s105, 16, [#allocation3], [#allocation4]
        $region16: #{model_forward.1} parent=11 // pred_fallthru
          _
      $region12: #{model_forward.1} parent=5 // pred_fallthru
        _
      %p108 = scmp.lt.s32.totalorder %s9, 2
      // Predicated region
      $region17: #{model_forward.1} parent=5 // pred_check
        %p109 = pneg %p108
      $region18: #{model_forward.1} parent=5 // pred_check_branch
        %111 = sbr.rel (%p109) target = $region20
      $region19: #{model_forward.1} parent=5 // pred_region
        // Predicated region
        $region21: #{model_forward.1} parent=19 // pred_check
          %p112 = pneg %p29
        $region22: #{model_forward.1} parent=19 // pred_check_branch
          %114 = sbr.rel (%p112) target = $region24
        $region23: #{model_forward.1} parent=19 // pred_region
          %s115 = sand.u32 %s19, 1
          %s116 = sand.u32 %s19, 1
          %s117 = smul.addr %s116, 240
          %s118 = scalar_lea.vmem [#allocation2], %s117
          %s119 = smul.u32 2, %s9
          %s120 = smul.addr %s119, 8
          %s121 = scalar_lea.vmem %s0, %s120
          // Predicated region
          $region25: #{model_forward.1} parent=23 // pred_check
            _
          $region26: #{model_forward.1} parent=23 // pred_check_branch
            %123 = sbr.rel (0) target = $region28
          $region27: #{model_forward.1} parent=23 // pred_region
            // Predicated region
            $region29: #{model_forward.1} parent=27 // pred_check
              _
            $region30: #{model_forward.1} parent=27 // pred_check_branch
              %125 = sbr.rel (0) target = $region32
            $region31: #{model_forward.1} parent=27 // pred_region
              // Predicated region
              $region44: #{model_forward.1} parent=31 // pred_check
                _
              $region45: #{model_forward.1} parent=31 // pred_check_branch
                %199 = sbr.rel (0) target = $region47
              $region46: #{model_forward.1} parent=31 // pred_region
                loop: start=0, step=1, limit=1
                $region48: #{model_forward.1} parent=46 // loop_pre_header
                  _
                $region49: #{model_forward.1} parent=46 // loop_header
                  %s201 = sphi 0, %s205
                  %p202 = scmp.ge.s32.totalorder %s201, 1
                  %s206 = sphi %s121, %s121
                  %s207 = sphi %s118, %s118
                $region50: #{model_forward.1} parent=46 // loop_header_branch
                  %204 = sbr.rel (%p202) target = $region54
                $region51: #{model_forward.1} parent=46 // loop_body
                  %v208 = vld [vmem:[%s206] sm:$0xff]
                  %209 = vst [vmem:[%s207] sm:$0xff] %v208
                  %v210 = vld [vmem:[%s206 + $0x8] sm:$0xff]
                  %211 = vst [vmem:[%s207 + $0x8] sm:$0xff] %v210
                  %v212 = vld [vmem:[%s206 + $0x20] sm:$0xff]
                  %213 = vst [vmem:[%s207 + $0x10] sm:$0xff] %v212
                  %v214 = vld [vmem:[%s206 + $0x28] sm:$0xff]
                  %215 = vst [vmem:[%s207 + $0x18] sm:$0xff] %v214
                  %v216 = vld [vmem:[%s206 + $0x40] sm:$0xff]
                  %217 = vst [vmem:[%s207 + $0x20] sm:$0xff] %v216
                  %v218 = vld [vmem:[%s206 + $0x48] sm:$0xff]
                  %219 = vst [vmem:[%s207 + $0x28] sm:$0xff] %v218
                  %v220 = vld [vmem:[%s206 + $0x60] sm:$0xff]
                  %221 = vst [vmem:[%s207 + $0x30] sm:$0xff] %v220
                  %v222 = vld [vmem:[%s206 + $0x68] sm:$0xff]
                  %223 = vst [vmem:[%s207 + $0x38] sm:$0xff] %v222
                  %v224 = vld [vmem:[%s206 + $0x80] sm:$0xff]
                  %225 = vst [vmem:[%s207 + $0x40] sm:$0xff] %v224
                  %v226 = vld [vmem:[%s206 + $0x88] sm:$0xff]
                  %227 = vst [vmem:[%s207 + $0x48] sm:$0xff] %v226
                  %v228 = vld [vmem:[%s206 + $0xa0] sm:$0xff]
                  %229 = vst [vmem:[%s207 + $0x50] sm:$0xff] %v228
                  %v230 = vld [vmem:[%s206 + $0xa8] sm:$0xff]
                  %231 = vst [vmem:[%s207 + $0x58] sm:$0xff] %v230
                  %v232 = vld [vmem:[%s206 + $0xc0] sm:$0xff]
                  %233 = vst [vmem:[%s207 + $0x60] sm:$0xff] %v232
                  %v234 = vld [vmem:[%s206 + $0xc8] sm:$0xff]
                  %235 = vst [vmem:[%s207 + $0x68] sm:$0xff] %v234
                  %v236 = vld [vmem:[%s206 + $0xe0] sm:$0xff]
                  %237 = vst [vmem:[%s207 + $0x70] sm:$0xff] %v236
                  %v238 = vld [vmem:[%s206 + $0xe8] sm:$0xff]
                  %239 = vst [vmem:[%s207 + $0x78] sm:$0xff] %v238
                  %v240 = vld [vmem:[%s206 + $0x100] sm:$0xff]
                  %241 = vst [vmem:[%s207 + $0x80] sm:$0xff] %v240
                  %v242 = vld [vmem:[%s206 + $0x108] sm:$0xff]
                  %243 = vst [vmem:[%s207 + $0x88] sm:$0xff] %v242
                  %v244 = vld [vmem:[%s206 + $0x120] sm:$0xff]
                  %245 = vst [vmem:[%s207 + $0x90] sm:$0xff] %v244
                  %v246 = vld [vmem:[%s206 + $0x128] sm:$0xff]
                  %247 = vst [vmem:[%s207 + $0x98] sm:$0xff] %v246
                  %v248 = vld [vmem:[%s206 + $0x140] sm:$0xff]
                  %249 = vst [vmem:[%s207 + $0xa0] sm:$0xff] %v248
                  %v250 = vld [vmem:[%s206 + $0x148] sm:$0xff]
                  %251 = vst [vmem:[%s207 + $0xa8] sm:$0xff] %v250
                  %v252 = vld [vmem:[%s206 + $0x160] sm:$0xff]
                  %253 = vst [vmem:[%s207 + $0xb0] sm:$0xff] %v252
                  %v254 = vld [vmem:[%s206 + $0x168] sm:$0xff]
                  %255 = vst [vmem:[%s207 + $0xb8] sm:$0xff] %v254
                  %v256 = vld [vmem:[%s206 + $0x180] sm:$0xff]
                  %257 = vst [vmem:[%s207 + $0xc0] sm:$0xff] %v256
                  %v258 = vld [vmem:[%s206 + $0x188] sm:$0xff]
                  %259 = vst [vmem:[%s207 + $0xc8] sm:$0xff] %v258
                  %v260 = vld [vmem:[%s206 + $0x1a0] sm:$0xff]
                  %261 = vst [vmem:[%s207 + $0xd0] sm:$0xff] %v260
                  %v262 = vld [vmem:[%s206 + $0x1a8] sm:$0xff]
                  %263 = vst [vmem:[%s207 + $0xd8] sm:$0xff] %v262
                  %v264 = vld [vmem:[%s206 + $0x1c0] sm:$0xff]
                  %265 = vst [vmem:[%s207 + $0xe0] sm:$0xff] %v264
                  %v266 = vld [vmem:[%s206 + $0x1c8] sm:$0xff]
                  %267 = vst [vmem:[%s207 + $0xe8] sm:$0xff] %v266
                $region52: #{model_forward.1} parent=46 // loop_footer
                  %s205 = sadd.s32 1, %s201
                $region53: #{model_forward.1} parent=46 // loop_footer_branch
                  %200 = sbr.rel target = $region49
                $region54: #{model_forward.1} parent=46 // loop_exit
                  _
              $region47: #{model_forward.1} parent=31 // pred_fallthru
                _
              // Predicated region
              $region55: #{model_forward.1} parent=31 // pred_check
                _
              $region56: #{model_forward.1} parent=31 // pred_check_branch
                %269 = sbr.rel target = $region58
              $region57: #{model_forward.1} parent=31 // pred_region
                _
              $region58: #{model_forward.1} parent=31 // pred_fallthru
                _
            $region32: #{model_forward.1} parent=27 // pred_fallthru
              _
            // Predicated region
            $region33: #{model_forward.1} parent=27 // pred_check
              _
            $region34: #{model_forward.1} parent=27 // pred_check_branch
              %127 = sbr.rel target = $region36
            $region35: #{model_forward.1} parent=27 // pred_region
              %s129 = ssub.s32 256, 1
              loop: start=0, step=1, limit=1
              $region37: #{model_forward.1} parent=35 // loop_pre_header
                _
              $region38: #{model_forward.1} parent=35 // loop_header
                %s131 = sphi 0, %s135
                %p132 = scmp.ge.s32.totalorder %s131, 1
                %s136 = sphi %s121, %s121
                %s137 = sphi %s118, %s118
              $region39: #{model_forward.1} parent=35 // loop_header_branch
                %134 = sbr.rel (%p132) target = $region43
              $region40: #{model_forward.1} parent=35 // loop_body
                %v138 = vld [vmem:[%s136] sm:%s129]
                %139 = vst [vmem:[%s137] sm:%s129] %v138
                %v140 = vld [vmem:[%s136 + $0x8] sm:%s129]
                %141 = vst [vmem:[%s137 + $0x8] sm:%s129] %v140
                %v142 = vld [vmem:[%s136 + $0x20] sm:%s129]
                %143 = vst [vmem:[%s137 + $0x10] sm:%s129] %v142
                %v144 = vld [vmem:[%s136 + $0x28] sm:%s129]
                %145 = vst [vmem:[%s137 + $0x18] sm:%s129] %v144
                %v146 = vld [vmem:[%s136 + $0x40] sm:%s129]
                %147 = vst [vmem:[%s137 + $0x20] sm:%s129] %v146
                %v148 = vld [vmem:[%s136 + $0x48] sm:%s129]
                %149 = vst [vmem:[%s137 + $0x28] sm:%s129] %v148
                %v150 = vld [vmem:[%s136 + $0x60] sm:%s129]
                %151 = vst [vmem:[%s137 + $0x30] sm:%s129] %v150
                %v152 = vld [vmem:[%s136 + $0x68] sm:%s129]
                %153 = vst [vmem:[%s137 + $0x38] sm:%s129] %v152
                %v154 = vld [vmem:[%s136 + $0x80] sm:%s129]
                %155 = vst [vmem:[%s137 + $0x40] sm:%s129] %v154
                %v156 = vld [vmem:[%s136 + $0x88] sm:%s129]
                %157 = vst [vmem:[%s137 + $0x48] sm:%s129] %v156
                %v158 = vld [vmem:[%s136 + $0xa0] sm:%s129]
                %159 = vst [vmem:[%s137 + $0x50] sm:%s129] %v158
                %v160 = vld [vmem:[%s136 + $0xa8] sm:%s129]
                %161 = vst [vmem:[%s137 + $0x58] sm:%s129] %v160
                %v162 = vld [vmem:[%s136 + $0xc0] sm:%s129]
                %163 = vst [vmem:[%s137 + $0x60] sm:%s129] %v162
                %v164 = vld [vmem:[%s136 + $0xc8] sm:%s129]
                %165 = vst [vmem:[%s137 + $0x68] sm:%s129] %v164
                %v166 = vld [vmem:[%s136 + $0xe0] sm:%s129]
                %167 = vst [vmem:[%s137 + $0x70] sm:%s129] %v166
                %v168 = vld [vmem:[%s136 + $0xe8] sm:%s129]
                %169 = vst [vmem:[%s137 + $0x78] sm:%s129] %v168
                %v170 = vld [vmem:[%s136 + $0x100] sm:%s129]
                %171 = vst [vmem:[%s137 + $0x80] sm:%s129] %v170
                %v172 = vld [vmem:[%s136 + $0x108] sm:%s129]
                %173 = vst [vmem:[%s137 + $0x88] sm:%s129] %v172
                %v174 = vld [vmem:[%s136 + $0x120] sm:%s129]
                %175 = vst [vmem:[%s137 + $0x90] sm:%s129] %v174
                %v176 = vld [vmem:[%s136 + $0x128] sm:%s129]
                %177 = vst [vmem:[%s137 + $0x98] sm:%s129] %v176
                %v178 = vld [vmem:[%s136 + $0x140] sm:%s129]
                %179 = vst [vmem:[%s137 + $0xa0] sm:%s129] %v178
                %v180 = vld [vmem:[%s136 + $0x148] sm:%s129]
                %181 = vst [vmem:[%s137 + $0xa8] sm:%s129] %v180
                %v182 = vld [vmem:[%s136 + $0x160] sm:%s129]
                %183 = vst [vmem:[%s137 + $0xb0] sm:%s129] %v182
                %v184 = vld [vmem:[%s136 + $0x168] sm:%s129]
                %185 = vst [vmem:[%s137 + $0xb8] sm:%s129] %v184
                %v186 = vld [vmem:[%s136 + $0x180] sm:%s129]
                %187 = vst [vmem:[%s137 + $0xc0] sm:%s129] %v186
                %v188 = vld [vmem:[%s136 + $0x188] sm:%s129]
                %189 = vst [vmem:[%s137 + $0xc8] sm:%s129] %v188
                %v190 = vld [vmem:[%s136 + $0x1a0] sm:%s129]
                %191 = vst [vmem:[%s137 + $0xd0] sm:%s129] %v190
                %v192 = vld [vmem:[%s136 + $0x1a8] sm:%s129]
                %193 = vst [vmem:[%s137 + $0xd8] sm:%s129] %v192
                %v194 = vld [vmem:[%s136 + $0x1c0] sm:%s129]
                %195 = vst [vmem:[%s137 + $0xe0] sm:%s129] %v194
                %v196 = vld [vmem:[%s136 + $0x1c8] sm:%s129]
                %197 = vst [vmem:[%s137 + $0xe8] sm:%s129] %v196
              $region41: #{model_forward.1} parent=35 // loop_footer
                %s135 = sadd.s32 1, %s131
              $region42: #{model_forward.1} parent=35 // loop_footer_branch
                %130 = sbr.rel target = $region38
              $region43: #{model_forward.1} parent=35 // loop_exit
                _
            $region36: #{model_forward.1} parent=27 // pred_fallthru
              _
          $region28: #{model_forward.1} parent=23 // pred_fallthru
            _
          %270 = vnop
        $region24: #{model_forward.1} parent=19 // pred_fallthru
          _
      $region20: #{model_forward.1} parent=5 // pred_fallthru
        _
      %p271 = scmp.le.s32.totalorder 1, %s9
      %p272 = scmp.lt.s32.totalorder %s9, 3
      %p273 = pnand %p271, %p272
      %p274 = pneg %p273
      // Predicated region
      $region59: #{model_forward.1} parent=5 // pred_check
        _
      $region60: #{model_forward.1} parent=5 // pred_check_branch
        %276 = sbr.rel (%p273) target = $region62
      $region61: #{model_forward.1} parent=5 // pred_region
        %s277 = ssub.s32 %s9, 1
        %s278 = sand.u32 %s22, 1
        %s279 = sand.u32 %s22, 1
        %s280 = smul.addr %s279, 240
        %s281 = scalar_lea.vmem [#allocation2], %s280
        // Predicated region
        $region63: #{model_forward.1} parent=61 // pred_check
          %p282 = pneg %p35
        $region64: #{model_forward.1} parent=61 // pred_check_branch
          %284 = sbr.rel (%p282) target = $region66
        $region65: #{model_forward.1} parent=61 // pred_region
          _
        $region66: #{model_forward.1} parent=61 // pred_fallthru
          _
        // Predicated region
        $region67: #{model_forward.1} parent=61 // pred_check
          %p285 = pneg %p56
        $region68: #{model_forward.1} parent=61 // pred_check_branch
          %287 = sbr.rel (%p285) target = $region70
        $region69: #{model_forward.1} parent=61 // pred_region
          %288 = dma.done [#allocation4], 16
        $region70: #{model_forward.1} parent=61 // pred_fallthru
          _
        %289 = sfence
        %s290 = sand.u32 %s22, 1
        %s291 = sand.u32 %s22, 1
        %s292 = smul.addr %s291, 240
        %s293 = scalar_lea.vmem [#allocation2], %s292
        %p294 = pneg %p35
        %p295 = pneg %p32
        %p296 = pneg %p56
        %p297 = pneg %p53
        %p298 = pneg %p82
        %p299 = pneg %p79
        %s300 = smul.u32 2, %s14
        %p301 = scmp.lt.s32.totalorder %s300, 3
        %s302 = scalar_select %p301, %s300, 3
        %s303 = smul.addr %s302, 8
        %s304 = scalar_lea.vmem %s2, %s303
        %s305 = smul.u32 2, %s14
        %s306 = smul.u32 2, %s14
        %p307 = scmp.lt.s32.totalorder %s306, 3
        %s308 = scalar_select %p307, %s306, 3
        %s309 = smul.addr %s308, 8
        %s310 = scalar_lea.vmem %s2, %s309
        %s311 = smul.u32 2, %s14
        %s312 = sld [smem:[#allocation3]]
        %s313 = sld [smem:[#allocation3 + $0x1]]
        %s314 = sld [smem:[#allocation3 + $0x2]]
        %s315 = sld [smem:[#allocation3 + $0x3]]
        %s316 = sld [smem:[#allocation3 + $0x4]]
        %s317 = sld [smem:[#allocation3 + $0x6]]
        %s318 = sld [smem:[#allocation3 + $0x8]]
        %s319 = sld [smem:[#allocation3 + $0x9]]
        %s320 = sadd.f32 %s316, %s317
        %s321 = smul.f32 %s318, %s320
        %s322 = sadd.f32 %s321, %s319
        loop: start=0, step=1, limit=2
        $region71: #{model_forward.1} parent=61 // loop_pre_header
          _
        $region72: #{model_forward.1} parent=61 // loop_header
          %s324 = sphi 0, %s328
          %p325 = scmp.ge.s32.totalorder %s324, 2
        $region73: #{model_forward.1} parent=61 // loop_header_branch
          %327 = sbr.rel (%p325) target = $region77
        $region74: #{model_forward.1} parent=61 // loop_body
          %s329 = smul.u32 %s324, 8
          %s330 = scalar_lea.vmem %s281, %s329 [#allocation2]
          %v331 = vld [vmem:[%s330] sm:$0xff]
          %v332 = vld [vmem:[%s330 + $0x10] sm:$0xff]
          %v333 = vld [vmem:[%s330 + $0x20] sm:$0xff]
          %s334 = sadd.s32 %s329, 48
          %s335 = scalar_lea.vmem %s281, %s334 [#allocation2]
          %v336 = vld [vmem:[%s335] sm:$0xff]
          %v337 = vld [vmem:[%s335 + $0x10] sm:$0xff]
          %v338 = vld [vmem:[%s335 + $0x20] sm:$0xff]
          %v339 = vstv %s312
          %v340 = vmul.f32 %v331, %v339
          %v341 = vmul.f32 %v332, %v339
          %v342 = vstv %s313
          %v343 = vmul.f32 %v332, %v342
          %v344 = vmul.f32 %v333, %v342
          %v345 = vadd.f32 %v340, %v343
          %v346 = vadd.f32 %v341, %v344
          %v347 = vstv %s314
          %v348 = vmul.f32 %v336, %v347
          %v349 = vmul.f32 %v337, %v347
          %v350 = vadd.f32 %v345, %v348
          %v351 = vadd.f32 %v346, %v349
          %v352 = vstv %s315
          %v353 = vmul.f32 %v337, %v352
          %v354 = vmul.f32 %v338, %v352
          %v355 = vadd.f32 %v350, %v353
          %v356 = vadd.f32 %v351, %v354
          %v357 = vmin.f32 %v355, %v356
          %s358 = sadd.s32 %s329, 96
          %s359 = scalar_lea.vmem %s281, %s358 [#allocation2]
          %v360 = vld [vmem:[%s359] sm:$0xff]
          %v361 = vld [vmem:[%s359 + $0x10] sm:$0xff]
          %v362 = vld [vmem:[%s359 + $0x20] sm:$0xff]
          %v363 = vmul.f32 %v336, %v339
          %v364 = vmul.f32 %v337, %v339
          %v365 = vmul.f32 %v337, %v342
          %v366 = vmul.f32 %v338, %v342
          %v367 = vadd.f32 %v363, %v365
          %v368 = vadd.f32 %v364, %v366
          %v369 = vmul.f32 %v360, %v347
          %v370 = vmul.f32 %v361, %v347
          %v371 = vadd.f32 %v367, %v369
          %v372 = vadd.f32 %v368, %v370
          %v373 = vmul.f32 %v361, %v352
          %v374 = vmul.f32 %v362, %v352
          %v375 = vadd.f32 %v371, %v373
          %v376 = vadd.f32 %v372, %v374
          %v377 = vmin.f32 %v375, %v376
          %v378 = vstv %s316
          %v379 = vmul.f32 %v357, %v378
          %v380 = vstv %s317
          %v381 = vmul.f32 %v377, %v380
          %v382 = vadd.f32 %v379, %v381
          %s383 = sadd.s32 %s329, 144
          %s384 = scalar_lea.vmem %s281, %s383 [#allocation2]
          %v385 = vld [vmem:[%s384] sm:$0xff]
          %v386 = vld [vmem:[%s384 + $0x10] sm:$0xff]
          %v387 = vld [vmem:[%s384 + $0x20] sm:$0xff]
          %v388 = vmul.f32 %v360, %v339
          %v389 = vmul.f32 %v361, %v339
          %v390 = vmul.f32 %v361, %v342
          %v391 = vmul.f32 %v362, %v342
          %v392 = vadd.f32 %v388, %v390
          %v393 = vadd.f32 %v389, %v391
          %v394 = vmul.f32 %v385, %v347
          %v395 = vmul.f32 %v386, %v347
          %v396 = vadd.f32 %v392, %v394
          %v397 = vadd.f32 %v393, %v395
          %v398 = vmul.f32 %v386, %v352
          %v399 = vmul.f32 %v387, %v352
          %v400 = vadd.f32 %v396, %v398
          %v401 = vadd.f32 %v397, %v399
          %v402 = vmin.f32 %v400, %v401
          %v403 = vmul.f32 %v377, %v378
          %v404 = vmul.f32 %v402, %v380
          %v405 = vadd.f32 %v403, %v404
          %v406 = vmax.f32 %v382, %v405
          %s407 = sadd.s32 %s329, 192
          %s408 = scalar_lea.vmem %s281, %s407 [#allocation2]
          %v409 = vld [vmem:[%s408] sm:$0xff]
          %v410 = vld [vmem:[%s408 + $0x10] sm:$0xff]
          %v411 = vld [vmem:[%s408 + $0x20] sm:$0xff]
          %v412 = vmul.f32 %v385, %v339
          %v413 = vmul.f32 %v386, %v339
          %v414 = vmul.f32 %v386, %v342
          %v415 = vmul.f32 %v387, %v342
          %v416 = vadd.f32 %v412, %v414
          %v417 = vadd.f32 %v413, %v415
          %v418 = vmul.f32 %v409, %v347
          %v419 = vmul.f32 %v410, %v347
          %v420 = vadd.f32 %v416, %v418
          %v421 = vadd.f32 %v417, %v419
          %v422 = vmul.f32 %v410, %v352
          %v423 = vmul.f32 %v411, %v352
          %v424 = vadd.f32 %v420, %v422
          %v425 = vadd.f32 %v421, %v423
          %v426 = vmin.f32 %v424, %v425
          %v427 = vmul.f32 %v402, %v378
          %v428 = vmul.f32 %v426, %v380
          %v429 = vadd.f32 %v427, %v428
          %v430 = vmax.f32 %v406, %v429
          %v431 = vstv %s322
          %v432 = vadd.f32 %v430, %v431
          %s433 = scalar_lea.vmem %s310, %s329
          %434 = vst [vmem:[%s433] sm:$0xff] %v432
        $region75: #{model_forward.1} parent=61 // loop_footer
          %s328 = sadd.s32 1, %s324
        $region76: #{model_forward.1} parent=61 // loop_footer_branch
          %323 = sbr.rel target = $region72
        $region77: #{model_forward.1} parent=61 // loop_exit
          _
        %s435 = smul.u32 2, %s14
        %p436 = scmp.lt.s32.totalorder %s435, 3
        %s437 = scalar_select %p436, %s435, 3
        %s438 = smul.addr %s437, 8
        %s439 = scalar_lea.vmem %s2, %s438
        // Predicated region
        $region78: #{model_forward.1} parent=61 // pred_check
          %p440 = pneg %p79
        $region79: #{model_forward.1} parent=61 // pred_check_branch
          %442 = sbr.rel (%p440) target = $region81
        $region80: #{model_forward.1} parent=61 // pred_region
          %s443 = smul.u32 2, %s14
        $region81: #{model_forward.1} parent=61 // pred_fallthru
          _
      $region62: #{model_forward.1} parent=5 // pred_fallthru
        _
      %p444 = scmp.le.s32.totalorder 2, %s9
      // Predicated region
      $region82: #{model_forward.1} parent=5 // pred_check
        %p445 = pneg %p444
      $region83: #{model_forward.1} parent=5 // pred_check_branch
        %447 = sbr.rel (%p445) target = $region85
      $region84: #{model_forward.1} parent=5 // pred_region
        %s448 = ssub.s32 %s9, 2
        // Predicated region
        $region86: #{model_forward.1} parent=84 // pred_check
          %p449 = pneg %p85
        $region87: #{model_forward.1} parent=84 // pred_check_branch
          %451 = sbr.rel (%p449) target = $region89
        $region88: #{model_forward.1} parent=84 // pred_region
          %s452 = smul.u32 2, %s15
          %p453 = scmp.lt.s32.totalorder %s452, 3
          %s454 = scalar_select %p453, %s452, 3
          %s455 = smul.addr %s454, 8
          %s456 = scalar_lea.vmem %s2, %s455
        $region89: #{model_forward.1} parent=84 // pred_fallthru
          _
      $region85: #{model_forward.1} parent=5 // pred_fallthru
        _
    $region6: #{model_forward.1} parent=1 // loop_footer
      %s13 = sadd.s32 1, %s9
    $region7: #{model_forward.1} parent=1 // loop_footer_branch
      %8 = sbr.rel target = $region3
    $region8: #{model_forward.1} parent=1 // loop_exit
      _
    %457 = vsyncpa [#allocation4], 1
    %s458 = scalar_lea.sflag [#allocation4], 1
    %459 = vsyncpa %s458, 1

</llo_original>
